<compile_context>
chip_gen: v5e
topology: v5e:2x2
jax: 0.10.0
libtpu: 0.0.40
codegen_flags: <defaults>
</compile_context>

<pallas_src>
import math
import jax
import jax.numpy as jnp
from jax.experimental import pallas as pl
from jax.experimental.pallas import tpu as pltpu


# ----------------------------- helpers ------------------------------------ #

def _round_up(x, m):
    return ((x + m - 1) // m) * m


def _cdiv(a, b):
    return -(-a // b)


def _hidden_tile(hp):
    # hp is always a multiple of 128; prefer 256 so the MXU N pass is full
    # on v6e/v7x (neutral on v5e's 128x128 MXU).
    return 256 if (hp % 256 == 0 and hp >= 256) else 128


def _k_tile(kp):
    # kp is always a multiple of 256 (see prepare_melstm_params).
    for t in (512, 256, 128):
        if kp % t == 0:
            return t
    return kp


# ------------------------- parameter preparation --------------------------- #

def prepare_melstm_params(weight_ih, weight_hh, bias, dtype=jnp.bfloat16):
    """One-time (per parameter set) weight/bias rearrangement.

    weight_ih: (4H, input_size), weight_hh: (4H, H), bias: (4H,)  [PyTorch layout]

    Returns:
      w_arranged: (Kp, 4*Hp) in `dtype` (bf16 by default for MXU/HBM
                  efficiency) with K = input_size + H padded to Kp (multiple
                  of 256 so v6e/v7x MXU K passes stay full), H padded to Hp
                  (multiple of 128); columns are grouped hidden-tile-major:
                  [... | i_j f_j g_j o_j | ...] for hidden column tile j, so
                  each grid column-block holds all 4 gates of the same hidden
                  slice.
      b_arranged: (1, 4*Hp) float32 with the same column ordering (bias is
                  added exactly once into the f32 accumulator, so it stays
                  full precision at negligible cost).
    """
    four_h, input_size = weight_ih.shape
    H = four_h // 4
    K = input_size + H
    Hp = _round_up(H, 128)
    Kp = _round_up(K, 256)
    th = _hidden_tile(Hp)
    n_jt = Hp // th

    # Fuse the two weight matrices along the contraction dim: pre = [x, h] @ W^T
    w = jnp.concatenate([weight_ih, weight_hh], axis=1)          # (4H, K)
    w = w.reshape(4, H, K)                                       # (gate, hcol, k)
    w = jnp.pad(w, ((0, 0), (0, Hp - H), (0, Kp - K)))           # (4, Hp, Kp)
    w = w.reshape(4, n_jt, th, Kp)
    w = jnp.transpose(w, (3, 1, 0, 2))                           # (Kp, jt, gate, th)
    w = w.reshape(Kp, 4 * Hp).astype(dtype)

    b = bias.reshape(4, H).astype(jnp.float32)
    b = jnp.pad(b, ((0, 0), (0, Hp - H)))                        # (4, Hp)
    b = b.reshape(4, n_jt, th)
    b = jnp.transpose(b, (1, 0, 2)).reshape(1, 4 * Hp)           # (1, 4*Hp)

    return w, b


# ------------------------------- kernel ------------------------------------ #

def _melstm_kernel(xh_ref, w_ref, b_ref, c_ref, h_out_ref, c_out_ref, acc_ref):
    k = pl.program_id(2)

    # Initialize the accumulator with the (f32) bias.
    @pl.when(k == 0)
    def _():
        acc_ref[...] = jnp.broadcast_to(b_ref[...], acc_ref.shape)

    # Single fused accumulation chain over K = input_size + hidden.
    # xh / W are in the same (possibly bf16) dtype; accumulate in f32.
    acc_ref[...] += jnp.dot(xh_ref[...], w_ref[...],
                            preferred_element_type=jnp.float32)

    @pl.when(k == pl.num_programs(2) - 1)
    def _():
        th = h_out_ref.shape[-1]
        # Lane-aligned per-gate slices read directly from the accumulator ref
        # (static ref slices -> streamed (8,128) tiles, no full 4*th block
        # held live in vregs).
        # sigmoid(x) = 0.5 * (tanh(0.5 * x) + 1)  -> one EUP op per element.
        i_g = 0.5 * (jnp.tanh(0.5 * acc_ref[:, 0 * th:1 * th]) + 1.0)
        f_g = 0.5 * (jnp.tanh(0.5 * acc_ref[:, 1 * th:2 * th]) + 1.0)
        g_g = jnp.tanh(acc_ref[:, 2 * th:3 * th])
        o_g = 0.5 * (jnp.tanh(0.5 * acc_ref[:, 3 * th:4 * th]) + 1.0)

        c_new = f_g * c_ref[...].astype(jnp.float32) + i_g * g_g
        h_new = o_g * jnp.tanh(c_new)

        c_out_ref[...] = c_new.astype(c_out_ref.dtype)
        h_out_ref[...] = h_new.astype(h_out_ref.dtype)


# ------------------------------- wrapper ----------------------------------- #

def melstm_cell(x, h, c, w_arranged, b_arranged):
    """Pallas-backed meLSTMCell forward.

    x: (B, input_size); h, c: (B, H)
    w_arranged, b_arranged: from prepare_melstm_params (done once, not per call)
    returns (h_new, c_new), each (B, H)
    """
    B, input_size = x.shape
    H = h.shape[-1]
    K = input_size + H

    Kp, four_hp = w_arranged.shape
    Hp = four_hp // 4
    th = _hidden_tile(Hp)
    n_jt = Hp // th
    tk = _k_tile(Kp)

    # Batch tile: cap at 256, pick tm to minimize Bp padding.  Bigger tm means
    # the weight matrix is streamed from HBM fewer times.
    MAX_TM = 256
    n_bt = _cdiv(B, MAX_TM)
    tm = _round_up(_cdiv(B, n_bt), 8)
    Bp = n_bt * tm

    # Activations are tiny vs. weights; concat/pad/cast them per call.
    xh = jnp.concatenate([x, h], axis=1).astype(w_arranged.dtype)   # (B, K)
    xh = jnp.pad(xh, ((0, Bp - B), (0, Kp - K)))
    c_p = jnp.pad(c, ((0, Bp - B), (0, Hp - H)))

    # Grid: hidden-tile first (v7x megacore splits W disjointly across cores),
    # batch-tile second, reduction (K) last.
    grid = (n_jt, Bp // tm, Kp // tk)

    h_out, c_out = pl.pallas_call(
        _melstm_kernel,
        out_shape=(
            jax.ShapeDtypeStruct((Bp, Hp), h.dtype),
            jax.ShapeDtypeStruct((Bp, Hp), c.dtype),
        ),
        grid_spec=pltpu.PrefetchScalarGridSpec(
            num_scalar_prefetch=0,
            grid=grid,
            in_specs=[
                pl.BlockSpec((tm, tk), lambda ji, bi, ki: (bi, ki)),       # [x,h]
                pl.BlockSpec((tk, 4 * th), lambda ji, bi, ki: (ki, ji)),   # W
                pl.BlockSpec((1, 4 * th), lambda ji, bi, ki: (0, ji)),     # bias
                pl.BlockSpec((tm, th), lambda ji, bi, ki: (bi, ji)),       # c
            ],
            out_specs=[
                pl.BlockSpec((tm, th), lambda ji, bi, ki: (bi, ji)),       # h'
                pl.BlockSpec((tm, th), lambda ji, bi, ki: (bi, ji)),       # c'
            ],
            scratch_shapes=[pltpu.VMEM((tm, 4 * th), jnp.float32)],
        ),
        compiler_params=pltpu.CompilerParams(
            dimension_semantics=("parallel", "parallel", "arbitrary"),
            vmem_limit_bytes=48 * 1024 * 1024,
        ),
    )(xh, w_arranged, b_arranged, c_p)

    return h_out[:B, :H], c_out[:B, :H]


# ------------------------------ reference ---------------------------------- #

def melstm_cell_ref(x, h, c, weight_ih, weight_hh, bias):
    """Pure-JAX reference matching the PyTorch forward exactly."""
    H = h.shape[-1]
    hi = jnp.dot(x, weight_ih.T, precision=jax.lax.Precision.HIGHEST)
    hh = jnp.dot(h, weight_hh.T, precision=jax.lax.Precision.HIGHEST)
    pre = hi + bias + hh
    i = jax.nn.sigmoid(pre[:, 0:H])
    f = jax.nn.sigmoid(pre[:, H:2 * H])
    g = jnp.tanh(pre[:, 2 * H:3 * H])
    o = jax.nn.sigmoid(pre[:, 3 * H:4 * H])
    c_new = f * c + i * g
    h_new = o * jnp.tanh(c_new)
    return h_new, c_new


# -------------------------------- demo ------------------------------------- #

if __name__ == "__main__":
    B = 8
    input_size = 32
    hidden_size = 32

    key = jax.random.PRNGKey(0)
    kx, kh, kc, kwi, kwh, kb = jax.random.split(key, 6)

    # Deterministic "reset_parameters": uniform(-stdv, stdv), stdv = 1/sqrt(H)
    stdv = 1.0 / math.sqrt(hidden_size)
    weight_ih = jax.random.uniform(kwi, (4 * hidden_size, input_size),
                                   jnp.float32, -stdv, stdv)
    weight_hh = jax.random.uniform(kwh, (4 * hidden_size, hidden_size),
                                   jnp.float32, -stdv, stdv)
    bias = jax.random.uniform(kb, (4 * hidden_size,), jnp.float32, -stdv, stdv)

    x = jax.random.normal(kx, (B, input_size), jnp.float32)
    h0 = jax.random.normal(kh, (B, hidden_size), jnp.float32)
    c0 = jax.random.normal(kc, (B, hidden_size), jnp.float32)

    h_ref, c_ref = melstm_cell_ref(x, h0, c0, weight_ih, weight_hh, bias)
    cell = jax.jit(melstm_cell)

    # --- f32 parameter path: tight accuracy check of the kernel itself. ---
    w32, b32 = prepare_melstm_params(weight_ih, weight_hh, bias,
                                     dtype=jnp.float32)
    h1, c1 = cell(x, h0, c0, w32, b32)
    jax.block_until_ready((h1, c1))
    assert jnp.allclose(h1, h_ref, atol=1e-4, rtol=1e-4), "h mismatch (f32)"
    assert jnp.allclose(c1, c_ref, atol=1e-4, rtol=1e-4), "c mismatch (f32)"

    # --- bf16 parameter path (recommended perf path): looser tolerance. ---
    wbf, bbf = prepare_melstm_params(weight_ih, weight_hh, bias,
                                     dtype=jnp.bfloat16)
    h2, c2 = cell(x, h0, c0, wbf, bbf)
    jax.block_until_ready((h2, c2))
    assert jnp.allclose(h2, h_ref, atol=6e-2, rtol=6e-2), "h mismatch (bf16)"
    assert jnp.allclose(c2, c_ref, atol=6e-2, rtol=6e-2), "c mismatch (bf16)"

    print("KERNEL_OK")
</pallas_src>

<mosaic_0001>
module attributes {stable_mosaic.version = 11 : i64} {
  func.func @_melstm_kernel(%arg0: i32, %arg1: i32, %arg2: i32, %arg3: memref<8x256xf32, #tpu.memory_space<vmem>>, %arg4: memref<256x512xf32, #tpu.memory_space<vmem>>, %arg5: memref<1x512xf32, #tpu.memory_space<vmem>>, %arg6: memref<8x128xf32, #tpu.memory_space<vmem>>, %arg7: memref<8x128xf32, #tpu.memory_space<vmem>>, %arg8: memref<8x128xf32, #tpu.memory_space<vmem>>, %arg9: memref<8x512xf32, #tpu.memory_space<vmem>>) attributes {dimension_semantics = [#tpu.dimension_semantics<parallel>, #tpu.dimension_semantics<parallel>, #tpu.dimension_semantics<arbitrary>], iteration_bounds = array<i64: 1, 1, 1>, scalar_prefetch = 0 : i64, scratch_operands = 1 : i64, tpu.core_type = #tpu.core_type<tc>, window_params = [{transform_indices = @transform_0, window_bounds = array<i64: 8, 256>}, {transform_indices = @transform_1, window_bounds = array<i64: 256, 512>}, {transform_indices = @transform_2, window_bounds = array<i64: 1, 512>}, {transform_indices = @transform_3, window_bounds = array<i64: 8, 128>}, {transform_indices = @transform_4, window_bounds = array<i64: 8, 128>}, {transform_indices = @transform_5, window_bounds = array<i64: 8, 128>}]} {
    %c0_i32 = arith.constant 0 : i32
    %0 = arith.cmpi eq, %arg2, %c0_i32 : i32
    %1 = arith.extui %0 : i1 to i32
    %c0_i32_0 = arith.constant 0 : i32
    %2 = arith.cmpi ne, %1, %c0_i32_0 : i32
    scf.if %2 {
      %c0_10 = arith.constant 0 : index
      %c0_11 = arith.constant 0 : index
      %12 = vector.load %arg5[%c0_10, %c0_11] : memref<1x512xf32, #tpu.memory_space<vmem>>, vector<1x512xf32>
      %13 = vector.shape_cast %12 : vector<1x512xf32> to vector<1x512xf32>
      %14 = vector.broadcast %13 : vector<1x512xf32> to vector<8x512xf32>
      %c0_12 = arith.constant 0 : index
      %c0_13 = arith.constant 0 : index
      %15 = vector.load %arg9[%c0_12, %c0_13] : memref<8x512xf32, #tpu.memory_space<vmem>>, vector<8x512xf32>
      tpu.vector_store %arg9[%c0_12, %c0_13], %14 {strides = array<i32>} : memref<8x512xf32, #tpu.memory_space<vmem>>, vector<8x512xf32>,
    } else {
    }
    %c0 = arith.constant 0 : index
    %c0_1 = arith.constant 0 : index
    %3 = vector.load %arg9[%c0, %c0_1] : memref<8x512xf32, #tpu.memory_space<vmem>>, vector<8x512xf32>
    %c0_2 = arith.constant 0 : index
    %c0_3 = arith.constant 0 : index
    %4 = vector.load %arg3[%c0_2, %c0_3] : memref<8x256xf32, #tpu.memory_space<vmem>>, vector<8x256xf32>
    %c0_4 = arith.constant 0 : index
    %c0_5 = arith.constant 0 : index
    %5 = vector.load %arg4[%c0_4, %c0_5] : memref<256x512xf32, #tpu.memory_space<vmem>>, vector<256x512xf32>
    %cst = arith.constant dense<0.000000e+00> : vector<8x512xf32>
    %6 = tpu.matmul %4, %5, %cst {dimension_numbers = #tpu.dot_dimension_numbers<[1], [0], [0], [1], [0, 0, 1, 1], [], []>} : vector<8x256xf32>, vector<256x512xf32>, vector<8x512xf32> -> vector<8x512xf32>
    %7 = arith.addf %3, %6 : vector<8x512xf32>
    %c0_6 = arith.constant 0 : index
    %c0_7 = arith.constant 0 : index
    %8 = vector.load %arg9[%c0_6, %c0_7] : memref<8x512xf32, #tpu.memory_space<vmem>>, vector<8x512xf32>
    tpu.vector_store %arg9[%c0_6, %c0_7], %7 {strides = array<i32>} : memref<8x512xf32, #tpu.memory_space<vmem>>, vector<8x512xf32>,
    %c0_i32_8 = arith.constant 0 : i32
    %9 = arith.cmpi eq, %arg2, %c0_i32_8 : i32
    %10 = arith.extui %9 : i1 to i32
    %c0_i32_9 = arith.constant 0 : i32
    %11 = arith.cmpi ne, %10, %c0_i32_9 : i32
    scf.if %11 {
      %c0_10 = arith.constant 0 : index
      %c0_11 = arith.constant 0 : index
      %12 = vector.load %arg9[%c0_10, %c0_11] : memref<8x512xf32, #tpu.memory_space<vmem>>, vector<8x128xf32>
      %cst_12 = arith.constant 5.000000e-01 : f32
      %13 = vector.broadcast %cst_12 : f32 to vector<8x128xf32>
      %14 = arith.mulf %13, %12 : vector<8x128xf32>
      %15 = math.tanh %14 : vector<8x128xf32>
      %cst_13 = arith.constant 1.000000e+00 : f32
      %16 = vector.broadcast %cst_13 : f32 to vector<8x128xf32>
      %17 = arith.addf %15, %16 : vector<8x128xf32>
      %cst_14 = arith.constant 5.000000e-01 : f32
      %18 = vector.broadcast %cst_14 : f32 to vector<8x128xf32>
      %19 = arith.mulf %18, %17 : vector<8x128xf32>
      %c0_15 = arith.constant 0 : index
      %c128 = arith.constant 128 : index
      %20 = vector.load %arg9[%c0_15, %c128] : memref<8x512xf32, #tpu.memory_space<vmem>>, vector<8x128xf32>
      %cst_16 = arith.constant 5.000000e-01 : f32
      %21 = vector.broadcast %cst_16 : f32 to vector<8x128xf32>
      %22 = arith.mulf %21, %20 : vector<8x128xf32>
      %23 = math.tanh %22 : vector<8x128xf32>
      %cst_17 = arith.constant 1.000000e+00 : f32
      %24 = vector.broadcast %cst_17 : f32 to vector<8x128xf32>
      %25 = arith.addf %23, %24 : vector<8x128xf32>
      %cst_18 = arith.constant 5.000000e-01 : f32
      %26 = vector.broadcast %cst_18 : f32 to vector<8x128xf32>
      %27 = arith.mulf %26, %25 : vector<8x128xf32>
      %c0_19 = arith.constant 0 : index
      %c256 = arith.constant 256 : index
      %28 = vector.load %arg9[%c0_19, %c256] : memref<8x512xf32, #tpu.memory_space<vmem>>, vector<8x128xf32>
      %29 = math.tanh %28 : vector<8x128xf32>
      %c0_20 = arith.constant 0 : index
      %c384 = arith.constant 384 : index
      %30 = vector.load %arg9[%c0_20, %c384] : memref<8x512xf32, #tpu.memory_space<vmem>>, vector<8x128xf32>
      %cst_21 = arith.constant 5.000000e-01 : f32
      %31 = vector.broadcast %cst_21 : f32 to vector<8x128xf32>
      %32 = arith.mulf %31, %30 : vector<8x128xf32>
      %33 = math.tanh %32 : vector<8x128xf32>
      %cst_22 = arith.constant 1.000000e+00 : f32
      %34 = vector.broadcast %cst_22 : f32 to vector<8x128xf32>
      %35 = arith.addf %33, %34 : vector<8x128xf32>
      %cst_23 = arith.constant 5.000000e-01 : f32
      %36 = vector.broadcast %cst_23 : f32 to vector<8x128xf32>
      %37 = arith.mulf %36, %35 : vector<8x128xf32>
      %c0_24 = arith.constant 0 : index
      %c0_25 = arith.constant 0 : index
      %38 = vector.load %arg6[%c0_24, %c0_25] : memref<8x128xf32, #tpu.memory_space<vmem>>, vector<8x128xf32>
      %39 = arith.mulf %27, %38 : vector<8x128xf32>
      %40 = arith.mulf %19, %29 : vector<8x128xf32>
      %41 = arith.addf %39, %40 : vector<8x128xf32>
      %42 = math.tanh %41 : vector<8x128xf32>
      %43 = arith.mulf %37, %42 : vector<8x128xf32>
      %c0_26 = arith.constant 0 : index
      %c0_27 = arith.constant 0 : index
      %44 = vector.load %arg8[%c0_26, %c0_27] : memref<8x128xf32, #tpu.memory_space<vmem>>, vector<8x128xf32>
      tpu.vector_store %arg8[%c0_26, %c0_27], %41 {strides = array<i32>} : memref<8x128xf32, #tpu.memory_space<vmem>>, vector<8x128xf32>,
      %c0_28 = arith.constant 0 : index
      %c0_29 = arith.constant 0 : index
      %45 = vector.load %arg7[%c0_28, %c0_29] : memref<8x128xf32, #tpu.memory_space<vmem>>, vector<8x128xf32>
      tpu.vector_store %arg7[%c0_28, %c0_29], %43 {strides = array<i32>} : memref<8x128xf32, #tpu.memory_space<vmem>>, vector<8x128xf32>,
    } else {
    }
    return
  }
  func.func @transform_0(%arg0: i32, %arg1: i32, %arg2: i32) -> (i32, i32) {
    %c0_i32 = arith.constant 0 : i32
    return %arg1, %arg2 : i32, i32
  }
  func.func @transform_1(%arg0: i32, %arg1: i32, %arg2: i32) -> (i32, i32) {
    %c0_i32 = arith.constant 0 : i32
    return %arg2, %arg0 : i32, i32
  }
  func.func @transform_2(%arg0: i32, %arg1: i32, %arg2: i32) -> (i32, i32) {
    %c0_i32 = arith.constant 0 : i32
    %c0_i32_0 = arith.constant 0 : i32
    return %c0_i32, %arg0 : i32, i32
  }
  func.func @transform_3(%arg0: i32, %arg1: i32, %arg2: i32) -> (i32, i32) {
    %c0_i32 = arith.constant 0 : i32
    return %arg1, %arg0 : i32, i32
  }
  func.func @transform_4(%arg0: i32, %arg1: i32, %arg2: i32) -> (i32, i32) {
    %c0_i32 = arith.constant 0 : i32
    return %arg1, %arg0 : i32, i32
  }
  func.func @transform_5(%arg0: i32, %arg1: i32, %arg2: i32) -> (i32, i32) {
    %c0_i32 = arith.constant 0 : i32
    return %arg1, %arg0 : i32, i32
  }
}

</mosaic_0001>

<llo_original>
// kernel: melstm_cell.1
$region0: #{melstm_cell.1}
  #allocation0 [shape = 'u32[]', space=smem, size = 0x4, offset = 0x4, fixed_abs, tag = 'smem constant byte address 0x4 - core index']
  #allocation1 [shape = 'u32[72,128]{1,0:T(1,128)}', space=vmem, size = 0x9000, scoped, tag = 'internal scratch']
  #allocation2 [shape = 'f32[8,512]{1,0:T(8,128)}', space=vmem, size = 0x4000, scoped, tag = 'scratch operand']
  %s0 = inlined_call_operand.vmem [shape: f32[8,256], index: 0, kind: input, shape index: {}]
  %s1 = inlined_call_operand.hbm [shape: f32[256,512], index: 1, kind: input, shape index: {}]
  %s2 = inlined_call_operand.vmem [shape: f32[1,512], index: 2, kind: input, shape index: {}]
  %s3 = inlined_call_operand.vmem [shape: f32[8,128], index: 3, kind: input, shape index: {}]
  %s4 = inlined_call_operand.hbm [shape: f32[8,128], index: 4, kind: output, shape index: {0}]
  %s5 = inlined_call_operand.hbm [shape: f32[8,128], index: 5, kind: output, shape index: {1}]
  %6 = xla_tuple %s4, %s5
  %s7 = sld [smem:[#allocation0]]
  $region46: #{melstm_cell.1} parent=0
    _
  %s9 = ssub.s32 1, %s7
  %s10 = scalar_select 0, %s9, %s7
  $region1: #{melstm_cell.1} parent=0
    #allocation3 [shape = 'u8[524288]{0}', space=vmem, size = 0x80000, scoped, tag = 'input window, operand 1, single buffered']
    #allocation4 [shape = 's32[1]{0}', space=sflag, size = 0x4, scoped, tag = 'scoped memory for melstm_cell.1']
    #allocation5 [shape = 's32[1]{0}', space=sflag, size = 0x4, scoped, tag = 'scoped memory for melstm_cell.1']
    #allocation6 [shape = 'u8[4096]{0}', space=vmem, size = 0x1000, scoped, tag = 'output window, operand 0, single buffered']
    #allocation7 [shape = 'u8[4096]{0}', space=vmem, size = 0x1000, scoped, tag = 'output window, operand 1, single buffered']
    #allocation8 [shape = 's32[1]{0}', space=sflag, size = 0x4, scoped, tag = 'scoped memory for melstm_cell.1']
    %11 = vsyncpa [#allocation4], 0
    %12 = vsyncpa [#allocation5], 0
    %13 = vsyncpa [#allocation8], 0
    // Predicated region
    $region2: #{melstm_cell.1} parent=1 // pred_check
      _
    $region3: #{melstm_cell.1} parent=1 // pred_check_branch
      %15 = sbr.rel (0) target = $region5
    $region4: #{melstm_cell.1} parent=1 // pred_region
      _
    $region5: #{melstm_cell.1} parent=1 // pred_fallthru
      _
    // Predicated region
    $region6: #{melstm_cell.1} parent=1 // pred_check
      _
    $region7: #{melstm_cell.1} parent=1 // pred_check_branch
      %17 = sbr.rel (0) target = $region9
    $region8: #{melstm_cell.1} parent=1 // pred_region
      %19 = vsyncadd [#allocation4], 0
      %s20 = sshll.u32 %s1, 4
      %s21 = int_to_ptr.hbm [resolvable:$true] %s20
      %s22 = sshll.u32 [#allocation3], 4
      %s23 = int_to_ptr.vmem [resolvable:$true] %s22
      %28 = dma.hbm_to_vmem [thread:$0]  %s21, 16384, %s23, [#allocation4], 512, 512, 32
    $region9: #{melstm_cell.1} parent=1 // pred_fallthru
      _
    // Predicated region
    $region10: #{melstm_cell.1} parent=1 // pred_check
      _
    $region11: #{melstm_cell.1} parent=1 // pred_check_branch
      %30 = sbr.rel (0) target = $region13
    $region12: #{melstm_cell.1} parent=1 // pred_region
      _
    $region13: #{melstm_cell.1} parent=1 // pred_fallthru
      _
    // Predicated region
    $region14: #{melstm_cell.1} parent=1 // pred_check
      _
    $region15: #{melstm_cell.1} parent=1 // pred_check_branch
      %32 = sbr.rel (0) target = $region17
    $region16: #{melstm_cell.1} parent=1 // pred_region
      _
    $region17: #{melstm_cell.1} parent=1 // pred_fallthru
      _
    // Predicated region
    $region18: #{melstm_cell.1} parent=1 // pred_check
      _
    $region19: #{melstm_cell.1} parent=1 // pred_check_branch
      %34 = sbr.rel (0) target = $region21
    $region20: #{melstm_cell.1} parent=1 // pred_region
      %36 = dma.done [#allocation4], 16384
    $region21: #{melstm_cell.1} parent=1 // pred_fallthru
      _
    %p37 = scmp.eq.s32.totalorder 0, 0
    // Predicated region
    $region22: #{melstm_cell.1} parent=1 // pred_check
      %p38 = pneg %p37
    $region23: #{melstm_cell.1} parent=1 // pred_check_branch
      %40 = sbr.rel (%p38) target = $region25
    $region24: #{melstm_cell.1} parent=1 // pred_region
      %v41 = vld [vmem:[%s2] sm:$0xf]
      %v43 = vperm.slane %v41, 0
      %v44 = vperm.slane %v41, 1
      %v45 = vperm.slane %v41, 2
      %v46 = vperm.slane %v41, 3
      %51 = vst [vmem:[#allocation2] sm:$0xff] %v43
      %52 = vst [vmem:[#allocation2 + $0x8] sm:$0xff] %v44
      %53 = vst [vmem:[#allocation2 + $0x10] sm:$0xff] %v45
      %54 = vst [vmem:[#allocation2 + $0x18] sm:$0xff] %v46
    $region25: #{melstm_cell.1} parent=1 // pred_fallthru
      _
    %v55 = vld [vmem:[#allocation2] sm:$0xff]
    %v56 = vld [vmem:[#allocation2 + $0x8] sm:$0xff]
    %v57 = vld [vmem:[#allocation2 + $0x10] sm:$0xff]
    %v58 = vld [vmem:[#allocation2 + $0x18] sm:$0xff]
    %v59 = vld [vmem:[%s0] sm:$0xff]
    %v60 = vld [vmem:[%s0 + $0x8] sm:$0xff]
    %v61 = vld [vmem:[#allocation3] sm:$0xff]
    %v62 = vld [vmem:[#allocation3 + $0x8] sm:$0xff]
    %v63 = vld [vmem:[#allocation3 + $0x10] sm:$0xff]
    %v64 = vld [vmem:[#allocation3 + $0x18] sm:$0xff]
    %v65 = vld [vmem:[#allocation3 + $0x20] sm:$0xff]
    %v66 = vld [vmem:[#allocation3 + $0x28] sm:$0xff]
    %v67 = vld [vmem:[#allocation3 + $0x30] sm:$0xff]
    %v68 = vld [vmem:[#allocation3 + $0x38] sm:$0xff]
    %v69 = vld [vmem:[#allocation3 + $0x40] sm:$0xff]
    %v70 = vld [vmem:[#allocation3 + $0x48] sm:$0xff]
    %v71 = vld [vmem:[#allocation3 + $0x50] sm:$0xff]
    %v72 = vld [vmem:[#allocation3 + $0x58] sm:$0xff]
    %v73 = vld [vmem:[#allocation3 + $0x60] sm:$0xff]
    %v74 = vld [vmem:[#allocation3 + $0x68] sm:$0xff]
    %v75 = vld [vmem:[#allocation3 + $0x70] sm:$0xff]
    %v76 = vld [vmem:[#allocation3 + $0x78] sm:$0xff]
    %v77 = vld [vmem:[#allocation3 + $0x80] sm:$0xff]
    %v78 = vld [vmem:[#allocation3 + $0x88] sm:$0xff]
    %v79 = vld [vmem:[#allocation3 + $0x90] sm:$0xff]
    %v80 = vld [vmem:[#allocation3 + $0x98] sm:$0xff]
    %v81 = vld [vmem:[#allocation3 + $0xa0] sm:$0xff]
    %v82 = vld [vmem:[#allocation3 + $0xa8] sm:$0xff]
    %v83 = vld [vmem:[#allocation3 + $0xb0] sm:$0xff]
    %v84 = vld [vmem:[#allocation3 + $0xb8] sm:$0xff]
    %v85 = vld [vmem:[#allocation3 + $0xc0] sm:$0xff]
    %v86 = vld [vmem:[#allocation3 + $0xc8] sm:$0xff]
    %v87 = vld [vmem:[#allocation3 + $0xd0] sm:$0xff]
    %v88 = vld [vmem:[#allocation3 + $0xd8] sm:$0xff]
    %v89 = vld [vmem:[#allocation3 + $0xe0] sm:$0xff]
    %v90 = vld [vmem:[#allocation3 + $0xe8] sm:$0xff]
    %v91 = vld [vmem:[#allocation3 + $0xf0] sm:$0xff]
    %v92 = vld [vmem:[#allocation3 + $0xf8] sm:$0xff]
    %v93 = vld [vmem:[#allocation3 + $0x100] sm:$0xff]
    %v94 = vld [vmem:[#allocation3 + $0x108] sm:$0xff]
    %v95 = vld [vmem:[#allocation3 + $0x110] sm:$0xff]
    %v96 = vld [vmem:[#allocation3 + $0x118] sm:$0xff]
    %v97 = vld [vmem:[#allocation3 + $0x120] sm:$0xff]
    %v98 = vld [vmem:[#allocation3 + $0x128] sm:$0xff]
    %v99 = vld [vmem:[#allocation3 + $0x130] sm:$0xff]
    %v100 = vld [vmem:[#allocation3 + $0x138] sm:$0xff]
    %v101 = vld [vmem:[#allocation3 + $0x140] sm:$0xff]
    %v102 = vld [vmem:[#allocation3 + $0x148] sm:$0xff]
    %v103 = vld [vmem:[#allocation3 + $0x150] sm:$0xff]
    %v104 = vld [vmem:[#allocation3 + $0x158] sm:$0xff]
    %v105 = vld [vmem:[#allocation3 + $0x160] sm:$0xff]
    %v106 = vld [vmem:[#allocation3 + $0x168] sm:$0xff]
    %v107 = vld [vmem:[#allocation3 + $0x170] sm:$0xff]
    %v108 = vld [vmem:[#allocation3 + $0x178] sm:$0xff]
    %v109 = vld [vmem:[#allocation3 + $0x180] sm:$0xff]
    %v110 = vld [vmem:[#allocation3 + $0x188] sm:$0xff]
    %v111 = vld [vmem:[#allocation3 + $0x190] sm:$0xff]
    %v112 = vld [vmem:[#allocation3 + $0x198] sm:$0xff]
    %v113 = vld [vmem:[#allocation3 + $0x1a0] sm:$0xff]
    %v114 = vld [vmem:[#allocation3 + $0x1a8] sm:$0xff]
    %v115 = vld [vmem:[#allocation3 + $0x1b0] sm:$0xff]
    %v116 = vld [vmem:[#allocation3 + $0x1b8] sm:$0xff]
    %v117 = vld [vmem:[#allocation3 + $0x1c0] sm:$0xff]
    %v118 = vld [vmem:[#allocation3 + $0x1c8] sm:$0xff]
    %v119 = vld [vmem:[#allocation3 + $0x1d0] sm:$0xff]
    %v120 = vld [vmem:[#allocation3 + $0x1d8] sm:$0xff]
    %v121 = vld [vmem:[#allocation3 + $0x1e0] sm:$0xff]
    %v122 = vld [vmem:[#allocation3 + $0x1e8] sm:$0xff]
    %v123 = vld [vmem:[#allocation3 + $0x1f0] sm:$0xff]
    %v124 = vld [vmem:[#allocation3 + $0x1f8] sm:$0xff]
    %v125 = vld [vmem:[#allocation3 + $0x200] sm:$0xff]
    %v126 = vld [vmem:[#allocation3 + $0x208] sm:$0xff]
    %v127 = vld [vmem:[#allocation3 + $0x210] sm:$0xff]
    %v128 = vld [vmem:[#allocation3 + $0x218] sm:$0xff]
    %v129 = vld [vmem:[#allocation3 + $0x220] sm:$0xff]
    %v130 = vld [vmem:[#allocation3 + $0x228] sm:$0xff]
    %v131 = vld [vmem:[#allocation3 + $0x230] sm:$0xff]
    %v132 = vld [vmem:[#allocation3 + $0x238] sm:$0xff]
    %v133 = vld [vmem:[#allocation3 + $0x240] sm:$0xff]
    %v134 = vld [vmem:[#allocation3 + $0x248] sm:$0xff]
    %v135 = vld [vmem:[#allocation3 + $0x250] sm:$0xff]
    %v136 = vld [vmem:[#allocation3 + $0x258] sm:$0xff]
    %v137 = vld [vmem:[#allocation3 + $0x260] sm:$0xff]
    %v138 = vld [vmem:[#allocation3 + $0x268] sm:$0xff]
    %v139 = vld [vmem:[#allocation3 + $0x270] sm:$0xff]
    %v140 = vld [vmem:[#allocation3 + $0x278] sm:$0xff]
    %v141 = vld [vmem:[#allocation3 + $0x280] sm:$0xff]
    %v142 = vld [vmem:[#allocation3 + $0x288] sm:$0xff]
    %v143 = vld [vmem:[#allocation3 + $0x290] sm:$0xff]
    %v144 = vld [vmem:[#allocation3 + $0x298] sm:$0xff]
    %v145 = vld [vmem:[#allocation3 + $0x2a0] sm:$0xff]
    %v146 = vld [vmem:[#allocation3 + $0x2a8] sm:$0xff]
    %v147 = vld [vmem:[#allocation3 + $0x2b0] sm:$0xff]
    %v148 = vld [vmem:[#allocation3 + $0x2b8] sm:$0xff]
    %v149 = vld [vmem:[#allocation3 + $0x2c0] sm:$0xff]
    %v150 = vld [vmem:[#allocation3 + $0x2c8] sm:$0xff]
    %v151 = vld [vmem:[#allocation3 + $0x2d0] sm:$0xff]
    %v152 = vld [vmem:[#allocation3 + $0x2d8] sm:$0xff]
    %v153 = vld [vmem:[#allocation3 + $0x2e0] sm:$0xff]
    %v154 = vld [vmem:[#allocation3 + $0x2e8] sm:$0xff]
    %v155 = vld [vmem:[#allocation3 + $0x2f0] sm:$0xff]
    %v156 = vld [vmem:[#allocation3 + $0x2f8] sm:$0xff]
    %v157 = vld [vmem:[#allocation3 + $0x300] sm:$0xff]
    %v158 = vld [vmem:[#allocation3 + $0x308] sm:$0xff]
    %v159 = vld [vmem:[#allocation3 + $0x310] sm:$0xff]
    %v160 = vld [vmem:[#allocation3 + $0x318] sm:$0xff]
    %v161 = vld [vmem:[#allocation3 + $0x320] sm:$0xff]
    %v162 = vld [vmem:[#allocation3 + $0x328] sm:$0xff]
    %v163 = vld [vmem:[#allocation3 + $0x330] sm:$0xff]
    %v164 = vld [vmem:[#allocation3 + $0x338] sm:$0xff]
    %v165 = vld [vmem:[#allocation3 + $0x340] sm:$0xff]
    %v166 = vld [vmem:[#allocation3 + $0x348] sm:$0xff]
    %v167 = vld [vmem:[#allocation3 + $0x350] sm:$0xff]
    %v168 = vld [vmem:[#allocation3 + $0x358] sm:$0xff]
    %v169 = vld [vmem:[#allocation3 + $0x360] sm:$0xff]
    %v170 = vld [vmem:[#allocation3 + $0x368] sm:$0xff]
    %v171 = vld [vmem:[#allocation3 + $0x370] sm:$0xff]
    %v172 = vld [vmem:[#allocation3 + $0x378] sm:$0xff]
    %v173 = vld [vmem:[#allocation3 + $0x380] sm:$0xff]
    %v174 = vld [vmem:[#allocation3 + $0x388] sm:$0xff]
    %v175 = vld [vmem:[#allocation3 + $0x390] sm:$0xff]
    %v176 = vld [vmem:[#allocation3 + $0x398] sm:$0xff]
    %v177 = vld [vmem:[#allocation3 + $0x3a0] sm:$0xff]
    %v178 = vld [vmem:[#allocation3 + $0x3a8] sm:$0xff]
    %v179 = vld [vmem:[#allocation3 + $0x3b0] sm:$0xff]
    %v180 = vld [vmem:[#allocation3 + $0x3b8] sm:$0xff]
    %v181 = vld [vmem:[#allocation3 + $0x3c0] sm:$0xff]
    %v182 = vld [vmem:[#allocation3 + $0x3c8] sm:$0xff]
    %v183 = vld [vmem:[#allocation3 + $0x3d0] sm:$0xff]
    %v184 = vld [vmem:[#allocation3 + $0x3d8] sm:$0xff]
    %v185 = vld [vmem:[#allocation3 + $0x3e0] sm:$0xff]
    %v186 = vld [vmem:[#allocation3 + $0x3e8] sm:$0xff]
    %v187 = vld [vmem:[#allocation3 + $0x3f0] sm:$0xff]
    %v188 = vld [vmem:[#allocation3 + $0x3f8] sm:$0xff]
    %189 = vmatpush.msra.mxu0 %v121
    %190 = vmatpush.msra.mxu0 %v117
    %191 = vmatpush.msra.mxu0 %v113
    %192 = vmatpush.msra.mxu0 %v109
    %193 = vmatpush.msra.mxu0 %v105
    %194 = vmatpush.msra.mxu0 %v101
    %195 = vmatpush.msra.mxu0 %v97
    %196 = vmatpush.msra.mxu0 %v93
    %197 = vmatpush.msra.mxu0 %v89
    %198 = vmatpush.msra.mxu0 %v85
    %199 = vmatpush.msra.mxu0 %v81
    %200 = vmatpush.msra.mxu0 %v77
    %201 = vmatpush.msra.mxu0 %v73
    %202 = vmatpush.msra.mxu0 %v69
    %203 = vmatpush.msra.mxu0 %v65
    %204 = vmatpush.msra.mxu0 %v61
    %205 = vmatmul.f32.gmra.mxu0 %v59
    %v206 = vpop.f32.mrf.mxu0
    %v207 = vadd.f32 0.0, %v206
    %208 = vdwg.mxu0
    %209 = vmatpush.msra.mxu0 %v185
    %210 = vmatpush.msra.mxu0 %v181
    %211 = vmatpush.msra.mxu0 %v177
    %212 = vmatpush.msra.mxu0 %v173
    %213 = vmatpush.msra.mxu0 %v169
    %214 = vmatpush.msra.mxu0 %v165
    %215 = vmatpush.msra.mxu0 %v161
    %216 = vmatpush.msra.mxu0 %v157
    %217 = vmatpush.msra.mxu0 %v153
    %218 = vmatpush.msra.mxu0 %v149
    %219 = vmatpush.msra.mxu0 %v145
    %220 = vmatpush.msra.mxu0 %v141
    %221 = vmatpush.msra.mxu0 %v137
    %222 = vmatpush.msra.mxu0 %v133
    %223 = vmatpush.msra.mxu0 %v129
    %224 = vmatpush.msra.mxu0 %v125
    %225 = vmatmul.f32.gmra.mxu0 %v60
    %v226 = vpop.f32.mrf.mxu0
    %v227 = vadd.f32 %v207, %v226
    %228 = vdwg.mxu0
    %229 = vmatpush.msra.mxu0 %v122
    %230 = vmatpush.msra.mxu0 %v118
    %231 = vmatpush.msra.mxu0 %v114
    %232 = vmatpush.msra.mxu0 %v110
    %233 = vmatpush.msra.mxu0 %v106
    %234 = vmatpush.msra.mxu0 %v102
    %235 = vmatpush.msra.mxu0 %v98
    %236 = vmatpush.msra.mxu0 %v94
    %237 = vmatpush.msra.mxu0 %v90
    %238 = vmatpush.msra.mxu0 %v86
    %239 = vmatpush.msra.mxu0 %v82
    %240 = vmatpush.msra.mxu0 %v78
    %241 = vmatpush.msra.mxu0 %v74
    %242 = vmatpush.msra.mxu0 %v70
    %243 = vmatpush.msra.mxu0 %v66
    %244 = vmatpush.msra.mxu0 %v62
    %245 = vmatmul.f32.gmra.mxu0 %v59
    %v246 = vpop.f32.mrf.mxu0
    %v247 = vadd.f32 0.0, %v246
    %248 = vdwg.mxu0
    %249 = vmatpush.msra.mxu0 %v186
    %250 = vmatpush.msra.mxu0 %v182
    %251 = vmatpush.msra.mxu0 %v178
    %252 = vmatpush.msra.mxu0 %v174
    %253 = vmatpush.msra.mxu0 %v170
    %254 = vmatpush.msra.mxu0 %v166
    %255 = vmatpush.msra.mxu0 %v162
    %256 = vmatpush.msra.mxu0 %v158
    %257 = vmatpush.msra.mxu0 %v154
    %258 = vmatpush.msra.mxu0 %v150
    %259 = vmatpush.msra.mxu0 %v146
    %260 = vmatpush.msra.mxu0 %v142
    %261 = vmatpush.msra.mxu0 %v138
    %262 = vmatpush.msra.mxu0 %v134
    %263 = vmatpush.msra.mxu0 %v130
    %264 = vmatpush.msra.mxu0 %v126
    %265 = vmatmul.f32.gmra.mxu0 %v60
    %v266 = vpop.f32.mrf.mxu0
    %v267 = vadd.f32 %v247, %v266
    %268 = vdwg.mxu0
    %269 = vmatpush.msra.mxu0 %v123
    %270 = vmatpush.msra.mxu0 %v119
    %271 = vmatpush.msra.mxu0 %v115
    %272 = vmatpush.msra.mxu0 %v111
    %273 = vmatpush.msra.mxu0 %v107
    %274 = vmatpush.msra.mxu0 %v103
    %275 = vmatpush.msra.mxu0 %v99
    %276 = vmatpush.msra.mxu0 %v95
    %277 = vmatpush.msra.mxu0 %v91
    %278 = vmatpush.msra.mxu0 %v87
    %279 = vmatpush.msra.mxu0 %v83
    %280 = vmatpush.msra.mxu0 %v79
    %281 = vmatpush.msra.mxu0 %v75
    %282 = vmatpush.msra.mxu0 %v71
    %283 = vmatpush.msra.mxu0 %v67
    %284 = vmatpush.msra.mxu0 %v63
    %285 = vmatmul.f32.gmra.mxu0 %v59
    %v286 = vpop.f32.mrf.mxu0
    %v287 = vadd.f32 0.0, %v286
    %288 = vdwg.mxu0
    %289 = vmatpush.msra.mxu0 %v187
    %290 = vmatpush.msra.mxu0 %v183
    %291 = vmatpush.msra.mxu0 %v179
    %292 = vmatpush.msra.mxu0 %v175
    %293 = vmatpush.msra.mxu0 %v171
    %294 = vmatpush.msra.mxu0 %v167
    %295 = vmatpush.msra.mxu0 %v163
    %296 = vmatpush.msra.mxu0 %v159
    %297 = vmatpush.msra.mxu0 %v155
    %298 = vmatpush.msra.mxu0 %v151
    %299 = vmatpush.msra.mxu0 %v147
    %300 = vmatpush.msra.mxu0 %v143
    %301 = vmatpush.msra.mxu0 %v139
    %302 = vmatpush.msra.mxu0 %v135
    %303 = vmatpush.msra.mxu0 %v131
    %304 = vmatpush.msra.mxu0 %v127
    %305 = vmatmul.f32.gmra.mxu0 %v60
    %v306 = vpop.f32.mrf.mxu0
    %v307 = vadd.f32 %v287, %v306
    %308 = vdwg.mxu0
    %309 = vmatpush.msra.mxu0 %v124
    %310 = vmatpush.msra.mxu0 %v120
    %311 = vmatpush.msra.mxu0 %v116
    %312 = vmatpush.msra.mxu0 %v112
    %313 = vmatpush.msra.mxu0 %v108
    %314 = vmatpush.msra.mxu0 %v104
    %315 = vmatpush.msra.mxu0 %v100
    %316 = vmatpush.msra.mxu0 %v96
    %317 = vmatpush.msra.mxu0 %v92
    %318 = vmatpush.msra.mxu0 %v88
    %319 = vmatpush.msra.mxu0 %v84
    %320 = vmatpush.msra.mxu0 %v80
    %321 = vmatpush.msra.mxu0 %v76
    %322 = vmatpush.msra.mxu0 %v72
    %323 = vmatpush.msra.mxu0 %v68
    %324 = vmatpush.msra.mxu0 %v64
    %325 = vmatmul.f32.gmra.mxu0 %v59
    %v326 = vpop.f32.mrf.mxu0
    %v327 = vadd.f32 0.0, %v326
    %328 = vdwg.mxu0
    %329 = vmatpush.msra.mxu0 %v188
    %330 = vmatpush.msra.mxu0 %v184
    %331 = vmatpush.msra.mxu0 %v180
    %332 = vmatpush.msra.mxu0 %v176
    %333 = vmatpush.msra.mxu0 %v172
    %334 = vmatpush.msra.mxu0 %v168
    %335 = vmatpush.msra.mxu0 %v164
    %336 = vmatpush.msra.mxu0 %v160
    %337 = vmatpush.msra.mxu0 %v156
    %338 = vmatpush.msra.mxu0 %v152
    %339 = vmatpush.msra.mxu0 %v148
    %340 = vmatpush.msra.mxu0 %v144
    %341 = vmatpush.msra.mxu0 %v140
    %342 = vmatpush.msra.mxu0 %v136
    %343 = vmatpush.msra.mxu0 %v132
    %344 = vmatpush.msra.mxu0 %v128
    %345 = vmatmul.f32.gmra.mxu0 %v60
    %v346 = vpop.f32.mrf.mxu0
    %v347 = vadd.f32 %v327, %v346
    %348 = vdwg.mxu0
    %v349 = vadd.f32 %v55, %v227
    %v350 = vadd.f32 %v56, %v267
    %v351 = vadd.f32 %v57, %v307
    %v352 = vadd.f32 %v58, %v347
    %353 = vst [vmem:[#allocation2] sm:$0xff] %v349
    %354 = vst [vmem:[#allocation2 + $0x8] sm:$0xff] %v350
    %355 = vst [vmem:[#allocation2 + $0x10] sm:$0xff] %v351
    %356 = vst [vmem:[#allocation2 + $0x18] sm:$0xff] %v352
    // Predicated region
    $region26: #{melstm_cell.1} parent=1 // pred_check
      %p357 = pneg %p37
    $region27: #{melstm_cell.1} parent=1 // pred_check_branch
      %359 = sbr.rel (%p357) target = $region29
    $region28: #{melstm_cell.1} parent=1 // pred_region
      %v360 = vld [vmem:[#allocation2] sm:$0xff]
      %v361 = vmul.f32 %v360, 0.5
      %v362 = vtanh.pop %v361
      %v363 = vadd.f32 %v362, 1.0
      %v364 = vmul.f32 %v363, 0.5
      %v365 = vld [vmem:[#allocation2 + $0x8] sm:$0xff]
      %v366 = vmul.f32 %v365, 0.5
      %v367 = vtanh.pop %v366
      %v368 = vadd.f32 %v367, 1.0
      %v369 = vmul.f32 %v368, 0.5
      %v370 = vld [vmem:[#allocation2 + $0x10] sm:$0xff]
      %v371 = vtanh.pop %v370
      %v372 = vld [vmem:[#allocation2 + $0x18] sm:$0xff]
      %v373 = vmul.f32 %v372, 0.5
      %v374 = vtanh.pop %v373
      %v375 = vadd.f32 %v374, 1.0
      %v376 = vmul.f32 %v375, 0.5
      %v377 = vld [vmem:[%s3] sm:$0xff]
      %v378 = vmul.f32 %v369, %v377
      %v379 = vmul.f32 %v364, %v371
      %v380 = vadd.f32 %v378, %v379
      %v381 = vtanh.pop %v380
      %v382 = vmul.f32 %v376, %v381
      %383 = vst [vmem:[#allocation7] sm:$0xff] %v380
      %384 = vst [vmem:[#allocation6] sm:$0xff] %v382
    $region29: #{melstm_cell.1} parent=1 // pred_fallthru
      _
    // Predicated region
    $region30: #{melstm_cell.1} parent=1 // pred_check
      _
    $region31: #{melstm_cell.1} parent=1 // pred_check_branch
      %386 = sbr.rel (0) target = $region33
    $region32: #{melstm_cell.1} parent=1 // pred_region
      %388 = vsyncadd [#allocation5], 0
      %s390 = sshll.u32 [#allocation6], 4
      %s391 = int_to_ptr.vmem [resolvable:$true] %s390
      %s392 = sshll.u32 %s4, 4
      %s393 = int_to_ptr.hbm [resolvable:$true] %s392
      %395 = dma.vmem_to_hbm [thread:$0]  %s391, 128, %s393, [#allocation5]
    $region33: #{melstm_cell.1} parent=1 // pred_fallthru
      _
    // Predicated region
    $region34: #{melstm_cell.1} parent=1 // pred_check
      _
    $region35: #{melstm_cell.1} parent=1 // pred_check_branch
      %397 = sbr.rel (0) target = $region37
    $region36: #{melstm_cell.1} parent=1 // pred_region
      %399 = vsyncadd [#allocation8], 0
      %s401 = sshll.u32 [#allocation7], 4
      %s402 = int_to_ptr.vmem [resolvable:$true] %s401
      %s403 = sshll.u32 %s5, 4
      %s404 = int_to_ptr.hbm [resolvable:$true] %s403
      %406 = dma.vmem_to_hbm [thread:$0]  %s402, 128, %s404, [#allocation8]
    $region37: #{melstm_cell.1} parent=1 // pred_fallthru
      _
    // Predicated region
    $region38: #{melstm_cell.1} parent=1 // pred_check
      _
    $region39: #{melstm_cell.1} parent=1 // pred_check_branch
      %408 = sbr.rel (0) target = $region41
    $region40: #{melstm_cell.1} parent=1 // pred_region
      %410 = dma.done [#allocation5], 128
    $region41: #{melstm_cell.1} parent=1 // pred_fallthru
      _
    // Predicated region
    $region42: #{melstm_cell.1} parent=1 // pred_check
      _
    $region43: #{melstm_cell.1} parent=1 // pred_check_branch
      %412 = sbr.rel (0) target = $region45
    $region44: #{melstm_cell.1} parent=1 // pred_region
      %414 = dma.done [#allocation8], 128
    $region45: #{melstm_cell.1} parent=1 // pred_fallthru
      _
    %415 = vsyncpa [#allocation4], 1
    %416 = vsyncpa [#allocation5], 1
    %417 = vsyncpa [#allocation8], 1

</llo_original>
